<compile_context>
chip_gen: v6e
topology: v6e:2x2x1
jax: 0.10.0
libtpu: 0.0.40
codegen_flags: <defaults>
</compile_context>

<pallas_src>
import math

import jax
import jax.numpy as jnp
from jax.experimental import pallas as pl
from jax.experimental.pallas import tpu as pltpu


def _pe_add_kernel(x_ref, pe_ref, o_ref):
    # x block: (B, TS, D); pe block: (TS, D) — trailing-dim broadcast over batch.
    o_ref[...] = x_ref[...] + pe_ref[...]


def _make_pe_table(seq_len, d_model, dtype):
    """Precompute the sinusoidal table once (pure JAX, mirrors the PyTorch buffer)."""
    position = jnp.arange(0, seq_len, dtype=jnp.float32)[:, None]            # [S, 1]
    div_term = jnp.exp(
        jnp.arange(0, d_model, 2, dtype=jnp.float32) * (-math.log(10000.0) / d_model)
    )                                                                         # [ceil(D/2)]
    angles = position * div_term                                              # [S, ceil(D/2)]
    pe = jnp.zeros((seq_len, d_model), jnp.float32)
    pe = pe.at[:, 0::2].set(jnp.sin(angles))
    pe = pe.at[:, 1::2].set(jnp.cos(angles)[:, : d_model // 2])               # odd-D safe
    return pe.astype(dtype)                                                   # [S, D]


def _sublane_rows(itemsize):
    """Native sublane row granularity for the dtype (f32: 8, bf16: 16, 8-bit: 32)."""
    return max(8, 32 // itemsize)


def _pick_seq_tile(s_pad, d, b, itemsize, sublane, footprint_budget_bytes=24 << 20):
    """Largest seq tile (multiple of `sublane`, dividing s_pad) whose live
    double-buffered footprint (x + out + pe blocks, x2 buffers) fits the budget."""
    per_row = (2 * b + 1) * d * itemsize * 2   # (x + out + pe) * double buffering
    for ts in (2048, 1024, 512, 256, 128, 64, 32, 16, 8):
        if ts % sublane != 0:
            continue
        if s_pad % ts != 0:
            continue
        if ts * per_row <= footprint_budget_bytes:
            return ts
    return sublane  # minimal tile; vmem_limit_bytes is sized to cover it anyway


def positional_encoding_forward(x, d_model, init_len):
    """x: [batch, seq_len, d_model] with seq_len == init_len (as in the reference)."""
    b, s, d = x.shape
    assert d == d_model and s == init_len, "forward requires seq_len == init_len"

    itemsize = jnp.dtype(x.dtype).itemsize
    sublane = _sublane_rows(itemsize)

    # Pad S up to the sublane granularity so a clean tile always exists.
    s_pad = pl.cdiv(s, sublane) * sublane
    x_p = x if s_pad == s else jnp.pad(x, ((0, 0), (0, s_pad - s), (0, 0)))

    # PE table computed once, outside the kernel, at the padded length.
    pe = _make_pe_table(s_pad, d, x.dtype)                                    # [S_pad, D]

    ts = _pick_seq_tile(s_pad, d, b, itemsize, sublane)
    n_seq_tiles = s_pad // ts

    # Scoped-VMEM limit: cover the double-buffered footprint with headroom,
    # never below 32 MiB (raises v5e's 16 MiB default; still <= v7x's 64 MiB).
    footprint = (2 * b + 1) * ts * d * itemsize * 2
    vmem_limit = min(max(32 << 20, footprint + (4 << 20)), 60 << 20)

    cost = pl.CostEstimate(
        flops=b * s_pad * d,
        transcendentals=0,
        bytes_accessed=(2 * b * s_pad * d + s_pad * d) * itemsize,
    )

    out = pl.pallas_call(
        _pe_add_kernel,
        out_shape=jax.ShapeDtypeStruct((b, s_pad, d), x.dtype),
        grid_spec=pltpu.PrefetchScalarGridSpec(
            num_scalar_prefetch=0,
            grid=(n_seq_tiles,),                                   # batch folded into block
            in_specs=[
                pl.BlockSpec((b, ts, d), lambda si: (0, si, 0)),   # x tile (whole batch)
                pl.BlockSpec((ts, d), lambda si: (si, 0)),         # PE tile (batch-invariant)
            ],
            out_specs=pl.BlockSpec((b, ts, d), lambda si: (0, si, 0)),
        ),
        compiler_params=pltpu.CompilerParams(
            dimension_semantics=("parallel",),
            vmem_limit_bytes=vmem_limit,
        ),
        cost_estimate=cost,
    )(x_p, pe)

    return out if s_pad == s else out[:, :s, :]


def _reference(x, seq_len, d_model):
    # Pure-JAX reference mirroring PyTorch: x + pos_encodings[None]
    return x + _make_pe_table(seq_len, d_model, jnp.float32)[None]


if __name__ == "__main__":
    # Small but lane-dense shapes: d_model = 128 keeps output stores unmasked.
    batch, seq_len, d_model = 2, 16, 128
    init_len = seq_len  # reference forward requires seq_len == init_len

    key = jax.random.PRNGKey(0)
    x = jax.random.normal(key, (batch, seq_len, d_model), dtype=jnp.float32)

    out = positional_encoding_forward(x, d_model=d_model, init_len=init_len)
    out = jax.block_until_ready(out)

    ref = _reference(x, seq_len, d_model)
    assert out.shape == (batch, seq_len, d_model)
    assert jnp.allclose(out, ref, atol=1e-5, rtol=1e-5)

    print("KERNEL_OK")
</pallas_src>

<mosaic_0001>
module attributes {stable_mosaic.version = 11 : i64} {
  func.func @_pe_add_kernel(%arg0: i32, %arg1: memref<2x16x128xf32, #tpu.memory_space<vmem>>, %arg2: memref<16x128xf32, #tpu.memory_space<vmem>>, %arg3: memref<2x16x128xf32, #tpu.memory_space<vmem>>) attributes {dimension_semantics = [#tpu.dimension_semantics<parallel>], iteration_bounds = array<i64: 1>, scalar_prefetch = 0 : i64, scratch_operands = 0 : i64, tpu.core_type = #tpu.core_type<tc>, window_params = [{transform_indices = @transform_0, window_bounds = array<i64: 2, 16, 128>}, {transform_indices = @transform_1, window_bounds = array<i64: 16, 128>}, {transform_indices = @transform_2, window_bounds = array<i64: 2, 16, 128>}]} {
    %c0 = arith.constant 0 : index
    %c0_0 = arith.constant 0 : index
    %c0_1 = arith.constant 0 : index
    %0 = vector.load %arg1[%c0, %c0_0, %c0_1] : memref<2x16x128xf32, #tpu.memory_space<vmem>>, vector<2x16x128xf32>
    %c0_2 = arith.constant 0 : index
    %c0_3 = arith.constant 0 : index
    %1 = vector.load %arg2[%c0_2, %c0_3] : memref<16x128xf32, #tpu.memory_space<vmem>>, vector<16x128xf32>
    %2 = vector.shape_cast %1 : vector<16x128xf32> to vector<1x16x128xf32>
    %3 = vector.broadcast %2 : vector<1x16x128xf32> to vector<2x16x128xf32>
    %4 = arith.addf %0, %3 : vector<2x16x128xf32>
    %c0_4 = arith.constant 0 : index
    %c0_5 = arith.constant 0 : index
    %c0_6 = arith.constant 0 : index
    %5 = vector.load %arg3[%c0_4, %c0_5, %c0_6] : memref<2x16x128xf32, #tpu.memory_space<vmem>>, vector<2x16x128xf32>
    tpu.vector_store %arg3[%c0_4, %c0_5, %c0_6], %4 {strides = array<i32>} : memref<2x16x128xf32, #tpu.memory_space<vmem>>, vector<2x16x128xf32>,
    return
  }
  func.func @transform_0(%arg0: i32) -> (i32, i32, i32) {
    %c0_i32 = arith.constant 0 : i32
    %c0_i32_0 = arith.constant 0 : i32
    %c0_i32_1 = arith.constant 0 : i32
    return %c0_i32, %arg0, %c0_i32_0 : i32, i32, i32
  }
  func.func @transform_1(%arg0: i32) -> (i32, i32) {
    %c0_i32 = arith.constant 0 : i32
    %c0_i32_0 = arith.constant 0 : i32
    return %arg0, %c0_i32 : i32, i32
  }
  func.func @transform_2(%arg0: i32) -> (i32, i32, i32) {
    %c0_i32 = arith.constant 0 : i32
    %c0_i32_0 = arith.constant 0 : i32
    %c0_i32_1 = arith.constant 0 : i32
    return %c0_i32, %arg0, %c0_i32_0 : i32, i32, i32
  }
}

</mosaic_0001>

<llo_original>
// kernel: tpu_custom_call.1
$region0: #{tpu_custom_call.1}
  #allocation0 [shape = 'u32[]', space=smem, size = 0x4, offset = 0x4, fixed_abs, tag = 'smem constant byte address 0x4 - core index']
  #allocation1 [shape = 'u32[144,128]{1,0:T(1,128)}', space=vmem, size = 0x12000, scoped, tag = 'internal scratch']
  %s0 = inlined_call_operand.hbm [shape: f32[2,16,128], index: 0, kind: input, shape index: {}]
  %s1 = inlined_call_operand.hbm [shape: f32[16,128], index: 1, kind: input, shape index: {}]
  %s2 = inlined_call_operand.hbm [shape: f32[2,16,128], index: 2, kind: output, shape index: {}]
  %s3 = sld [smem:[#allocation0]]
  $region26: #{tpu_custom_call.1} parent=0
    _
  %s5 = ssub.s32 1, %s3
  %s6 = scalar_select 0, %s5, %s3
  $region1: #{tpu_custom_call.1} parent=0
    #allocation2 [shape = 'u8[16384]{0}', space=vmem, size = 0x4000, scoped, tag = 'input window, operand 0, single buffered']
    #allocation3 [shape = 's32[1]{0}', space=sflag, size = 0x4, scoped, tag = 'scoped memory for tpu_custom_call.1']
    #allocation4 [shape = 's32[1]{0}', space=sflag, size = 0x4, scoped, tag = 'scoped memory for tpu_custom_call.1']
    #allocation5 [shape = 'u8[8192]{0}', space=vmem, size = 0x2000, scoped, tag = 'input window, operand 1, single buffered']
    #allocation6 [shape = 's32[1]{0}', space=sflag, size = 0x4, scoped, tag = 'scoped memory for tpu_custom_call.1']
    #allocation7 [shape = 'u8[16384]{0}', space=vmem, size = 0x4000, scoped, tag = 'output window, operand 0, single buffered']
    %7 = vsyncpa [#allocation3], 0
    %8 = vsyncpa [#allocation6], 0
    %9 = vsyncpa [#allocation4], 0
    // Predicated region
    $region2: #{tpu_custom_call.1} parent=1 // pred_check
      _
    $region3: #{tpu_custom_call.1} parent=1 // pred_check_branch
      %11 = sbr.rel (0) target = $region5
    $region4: #{tpu_custom_call.1} parent=1 // pred_region
      %s13 = ssub.s32 512, 512
      %14 = vsyncadd [#allocation3], %s13
      %s15 = sshll.u32 [#allocation2], 4
      %s16 = int_to_ptr.vmem [resolvable:$true] %s15
      %21 = dma.hbm_to_vmem [thread:$0]  %s0, 512, %s16, [#allocation3], 128, 128, 8
    $region5: #{tpu_custom_call.1} parent=1 // pred_fallthru
      _
    // Predicated region
    $region6: #{tpu_custom_call.1} parent=1 // pred_check
      _
    $region7: #{tpu_custom_call.1} parent=1 // pred_check_branch
      %23 = sbr.rel (0) target = $region9
    $region8: #{tpu_custom_call.1} parent=1 // pred_region
      %s25 = ssub.s32 256, 256
      %26 = vsyncadd [#allocation6], %s25
      %s27 = sshll.u32 [#allocation5], 4
      %s28 = int_to_ptr.vmem [resolvable:$true] %s27
      %33 = dma.hbm_to_vmem [thread:$0]  %s1, 256, %s28, [#allocation6], 128, 128, 8
    $region9: #{tpu_custom_call.1} parent=1 // pred_fallthru
      _
    // Predicated region
    $region10: #{tpu_custom_call.1} parent=1 // pred_check
      _
    $region11: #{tpu_custom_call.1} parent=1 // pred_check_branch
      %35 = sbr.rel (0) target = $region13
    $region12: #{tpu_custom_call.1} parent=1 // pred_region
      %36 = dma.done [#allocation3], 512
    $region13: #{tpu_custom_call.1} parent=1 // pred_fallthru
      _
    // Predicated region
    $region14: #{tpu_custom_call.1} parent=1 // pred_check
      _
    $region15: #{tpu_custom_call.1} parent=1 // pred_check_branch
      %38 = sbr.rel (0) target = $region17
    $region16: #{tpu_custom_call.1} parent=1 // pred_region
      %39 = dma.done [#allocation6], 256
    $region17: #{tpu_custom_call.1} parent=1 // pred_fallthru
      _
    %v40 = vld [vmem:[#allocation2] sm:$0xff]
    %v41 = vld [vmem:[#allocation2 + $0x8] sm:$0xff]
    %v42 = vld [vmem:[#allocation2 + $0x10] sm:$0xff]
    %v43 = vld [vmem:[#allocation2 + $0x18] sm:$0xff]
    %v44 = vld [vmem:[#allocation5] sm:$0xff]
    %v45 = vld [vmem:[#allocation5 + $0x8] sm:$0xff]
    %v46 = vadd.f32 %v40, %v44
    %v47 = vadd.f32 %v41, %v45
    %v48 = vadd.f32 %v42, %v44
    %v49 = vadd.f32 %v43, %v45
    %50 = vst [vmem:[#allocation7] sm:$0xff] %v46
    %51 = vst [vmem:[#allocation7 + $0x8] sm:$0xff] %v47
    %52 = vst [vmem:[#allocation7 + $0x10] sm:$0xff] %v48
    %53 = vst [vmem:[#allocation7 + $0x18] sm:$0xff] %v49
    // Predicated region
    $region18: #{tpu_custom_call.1} parent=1 // pred_check
      _
    $region19: #{tpu_custom_call.1} parent=1 // pred_check_branch
      %55 = sbr.rel (0) target = $region21
    $region20: #{tpu_custom_call.1} parent=1 // pred_region
      %s57 = ssub.s32 512, 512
      %58 = vsyncadd [#allocation4], %s57
      %s59 = sshll.u32 [#allocation7], 4
      %s60 = int_to_ptr.vmem [resolvable:$true] %s59
      %65 = dma.vmem_to_hbm [thread:$0]  %s60, 512, %s2, [#allocation4], 128, 128, 8
    $region21: #{tpu_custom_call.1} parent=1 // pred_fallthru
      _
    // Predicated region
    $region22: #{tpu_custom_call.1} parent=1 // pred_check
      _
    $region23: #{tpu_custom_call.1} parent=1 // pred_check_branch
      %67 = sbr.rel (0) target = $region25
    $region24: #{tpu_custom_call.1} parent=1 // pred_region
      %68 = dma.done [#allocation4], 512
    $region25: #{tpu_custom_call.1} parent=1 // pred_fallthru
      _
    %69 = vsyncpa [#allocation3], 1
    %70 = vsyncpa [#allocation6], 1
    %71 = vsyncpa [#allocation4], 1

</llo_original>
